<compile_context>
chip_gen: v7x
topology: tpu7x:2x2x1
jax: 0.10.0
libtpu: 0.0.40
codegen_flags: <defaults>
</compile_context>

<pallas_src>
import functools

import jax
import jax.numpy as jnp
from jax.experimental import pallas as pl
from jax.experimental.pallas import tpu as pltpu


def _round_up(v, m):
    return (v + m - 1) // m * m


def _conv1x1_kernel(x_ref, w_ref, b_ref, o_ref, *, nb, use_act):
    # x_ref: (NB, Cin, TS)   w_ref: (Cout, Cin)   b_ref: (Cout, 1)
    # o_ref: (NB, Cout, TS)
    w = w_ref[...]
    b = b_ref[...]
    # Small static unroll over the batch block; each iteration is a tiny MXU
    # matmul that hides under the input/output DMAs (memory-bound op).
    for i in range(nb):
        y = jnp.dot(w, x_ref[i], preferred_element_type=jnp.float32) + b
        if use_act:
            # SiLU kept exact and in f32 (v5e has no bf16 VPU/EUP).
            # TODO(synk): pl.reciprocal(1+exp(-y), approx=True) is a small EUP
            # win on v7x if a profile ever shows the epilogue exposed.
            y = y * jax.nn.sigmoid(y)
        o_ref[i] = y.astype(o_ref.dtype)


def _physical_vmem_bytes():
    try:
        info = pltpu.get_tpu_info()
        for attr in ("vmem_capacity_bytes", "vmem_size_bytes", "vmem_bytes"):
            v = getattr(info, attr, None)
            if v:
                return int(v)
    except Exception:
        pass
    return 64 << 20  # conservative default: v7x per-TensorCore VMEM


def _vmem_footprint_bytes(nb, cin, cout, ts, itemsize=4):
    """Pipeline working set: every operand double-buffered, channel dims padded
    to the 8-sublane granule, lane dims padded to 128."""
    cin_p = _round_up(cin, 8)
    cout_p = _round_up(cout, 8)
    ts_p = _round_up(ts, 128)
    x_blk = nb * cin_p * ts_p * itemsize
    o_blk = nb * cout_p * ts_p * itemsize
    w_blk = cout_p * _round_up(cin, 128) * itemsize
    b_blk = cout_p * 128 * itemsize
    return 2 * (x_blk + o_blk + w_blk + b_blk)


def _pick_tiles(n, hw, cin, cout, budget, *, max_spatial_tile, max_batch_block,
                target_step_bytes=4 << 20, itemsize=4):
    # Spatial (lane) tile: a multiple of 128 (or the full dim when hw < 128),
    # as large as the VMEM budget allows -> multi-MiB per-step HBM traffic.
    if hw <= 128:
        tile_s = hw
    else:
        tile_s = min(_round_up(hw, 128), _round_up(max_spatial_tile, 128))
        while tile_s > 128 and _vmem_footprint_bytes(1, cin, cout, tile_s,
                                                     itemsize) > budget:
            tile_s -= 128
    # Batch block: grow (powers of two, small static unroll) until per-step
    # HBM bytes reach the target or VMEM runs out.  Rescues tiny images.
    nb = 1
    per_sample = (cin + cout) * tile_s * itemsize
    while (nb < min(n, max_batch_block)
           and nb * per_sample < target_step_bytes
           and _vmem_footprint_bytes(nb * 2, cin, cout, tile_s,
                                     itemsize) <= budget):
        nb *= 2
    nb = min(nb, n)
    return nb, tile_s


def basic_conv_act(x_nchw, weight, bias, *, use_act=True,
                   max_spatial_tile=64 * 1024, max_batch_block=8):
    """1x1 Conv2d + optional SiLU (BasicConvAct forward).

    x_nchw: (N, Cin, H, W)
    weight: (Cout, Cin) or (Cout, Cin, 1, 1)   (PyTorch Conv2d weight)
    bias:   (Cout,)
    returns (N, Cout, H, W)
    """
    # TODO(synk): only kernel_size=1 (the module's default) is implemented as a
    # Pallas kernel; general kernel_size/dilation would need an im2col or
    # shifted-accumulate formulation.
    N, Cin, H, W = x_nchw.shape
    if weight.ndim == 4:
        weight = weight.reshape(weight.shape[0], weight.shape[1])
    Cout = weight.shape[0]
    HW = H * W
    itemsize = jnp.dtype(x_nchw.dtype).itemsize

    x_rows = x_nchw.reshape(N, Cin, HW)          # free reshape, stays NCHW
    b_col = bias.reshape(Cout, 1)

    phys_vmem = _physical_vmem_bytes()
    budget = min((phys_vmem * 5) // 8, 48 << 20)     # pipeline working-set budget
    nb, tile_s = _pick_tiles(N, HW, Cin, Cout, budget,
                             max_spatial_tile=max_spatial_tile,
                             max_batch_block=max_batch_block,
                             itemsize=itemsize)
    footprint = _vmem_footprint_bytes(nb, Cin, Cout, tile_s, itemsize)
    vmem_limit = int(min(phys_vmem - (4 << 20),
                         max(footprint + (8 << 20), 32 << 20)))

    # Many-iteration spatial axis first so megacore (v7x) splits useful work
    # even when the batch-block axis has a single iteration.
    grid = (pl.cdiv(HW, tile_s), pl.cdiv(N, nb))

    kernel = functools.partial(_conv1x1_kernel, nb=nb, use_act=use_act)

    out = pl.pallas_call(
        kernel,
        out_shape=jax.ShapeDtypeStruct((N, Cout, HW), x_nchw.dtype),
        grid_spec=pltpu.PrefetchScalarGridSpec(
            num_scalar_prefetch=0,
            grid=grid,
            in_specs=[
                pl.BlockSpec((nb, Cin, tile_s), lambda s, b: (b, 0, s)),
                # Weight/bias stay fully resident in VMEM (tiny at these
                # channel counts).
                # TODO(synk): add Cin/Cout tiling (reduction grid axis + VMEM
                # accumulator via pl.when) once channel counts reach ~128+.
                pl.BlockSpec((Cout, Cin), lambda s, b: (0, 0)),
                pl.BlockSpec((Cout, 1), lambda s, b: (0, 0)),
            ],
            out_specs=pl.BlockSpec((nb, Cout, tile_s), lambda s, b: (b, 0, s)),
        ),
        compiler_params=pltpu.CompilerParams(
            dimension_semantics=("parallel", "parallel"),
            vmem_limit_bytes=vmem_limit),
    )(x_rows, weight, b_col)

    return out.reshape(N, Cout, H, W)            # free reshape back to NCHW


def _reference(x_nchw, weight, bias, use_act=True):
    # Pure-JAX reference for the 1x1 conv + SiLU.
    y = jnp.einsum("nchw,oc->nohw", x_nchw, weight) + bias[None, :, None, None]
    if use_act:
        y = y * jax.nn.sigmoid(y)
    return y


if __name__ == "__main__":
    key = jax.random.PRNGKey(0)
    k1, k2, k3 = jax.random.split(key, 3)

    N, Cin, Cout, H, W = 2, 4, 8, 16, 16
    x = jax.random.normal(k1, (N, Cin, H, W), dtype=jnp.float32)
    # Mimics Conv2d(in=4, out=8, kernel_size=1, bias=True) parameters.
    weight = jax.random.normal(k2, (Cout, Cin), dtype=jnp.float32) * 0.1
    bias = jax.random.normal(k3, (Cout,), dtype=jnp.float32) * 0.1

    out = basic_conv_act(x, weight, bias)
    out = jax.block_until_ready(out)

    ref = _reference(x, weight, bias)
    assert out.shape == (N, Cout, H, W)
    assert jnp.allclose(out, ref, atol=1e-5, rtol=1e-5), "mismatch vs reference"

    print("KERNEL_OK")
</pallas_src>

<mosaic_0001>
module attributes {stable_mosaic.version = 11 : i64} {
  func.func @_conv1x1_kernel(%arg0: i32, %arg1: i32, %arg2: memref<2x4x256xf32, #tpu.memory_space<vmem>>, %arg3: memref<8x4xf32, #tpu.memory_space<vmem>>, %arg4: memref<8x1xf32, #tpu.memory_space<vmem>>, %arg5: memref<2x8x256xf32, #tpu.memory_space<vmem>>) attributes {dimension_semantics = [#tpu.dimension_semantics<parallel>, #tpu.dimension_semantics<parallel>], iteration_bounds = array<i64: 1, 1>, scalar_prefetch = 0 : i64, scratch_operands = 0 : i64, tpu.core_type = #tpu.core_type<tc>, window_params = [{transform_indices = @transform_0, window_bounds = array<i64: 2, 4, 256>}, {pipeline_mode = #tpu.pipeline_mode<synchronous>, transform_indices = @transform_1, window_bounds = array<i64: 8, 4>}, {pipeline_mode = #tpu.pipeline_mode<synchronous>, transform_indices = @transform_2, window_bounds = array<i64: 8, 1>}, {transform_indices = @transform_3, window_bounds = array<i64: 2, 8, 256>}]} {
    %c0 = arith.constant 0 : index
    %c0_0 = arith.constant 0 : index
    %0 = vector.load %arg3[%c0, %c0_0] : memref<8x4xf32, #tpu.memory_space<vmem>>, vector<8x4xf32>
    %c0_1 = arith.constant 0 : index
    %c0_2 = arith.constant 0 : index
    %1 = vector.load %arg4[%c0_1, %c0_2] : memref<8x1xf32, #tpu.memory_space<vmem>>, vector<8x1xf32>
    %c0_3 = arith.constant 0 : index
    %c0_4 = arith.constant 0 : index
    %c0_5 = arith.constant 0 : index
    %2 = vector.load %arg2[%c0_3, %c0_4, %c0_5] : memref<2x4x256xf32, #tpu.memory_space<vmem>>, vector<1x4x256xf32>
    %3 = vector.shape_cast %2 : vector<1x4x256xf32> to vector<4x256xf32>
    %cst = arith.constant dense<0.000000e+00> : vector<8x256xf32>
    %4 = tpu.matmul %0, %3, %cst {dimension_numbers = #tpu.dot_dimension_numbers<[1], [0], [0], [1], [0, 0, 1, 1], [], []>} : vector<8x4xf32>, vector<4x256xf32>, vector<8x256xf32> -> vector<8x256xf32>
    %5 = vector.broadcast %1 : vector<8x1xf32> to vector<8x256xf32>
    %6 = arith.addf %4, %5 : vector<8x256xf32>
    %7 = arith.negf %6 : vector<8x256xf32>
    %8 = math.exp %7 : vector<8x256xf32>
    %cst_6 = arith.constant 1.000000e+00 : f32
    %9 = vector.broadcast %cst_6 : f32 to vector<8x256xf32>
    %10 = arith.addf %9, %8 : vector<8x256xf32>
    %11 = arith.divf %9, %10 : vector<8x256xf32>
    %12 = arith.mulf %6, %11 : vector<8x256xf32>
    %c0_7 = arith.constant 0 : index
    %c0_8 = arith.constant 0 : index
    %c0_9 = arith.constant 0 : index
    %13 = vector.load %arg5[%c0_7, %c0_8, %c0_9] : memref<2x8x256xf32, #tpu.memory_space<vmem>>, vector<1x8x256xf32>
    %14 = vector.shape_cast %13 : vector<1x8x256xf32> to vector<8x256xf32>
    %15 = vector.shape_cast %12 : vector<8x256xf32> to vector<1x8x256xf32>
    tpu.vector_store %arg5[%c0_7, %c0_8, %c0_9], %15 {strides = array<i32>} : memref<2x8x256xf32, #tpu.memory_space<vmem>>, vector<1x8x256xf32>,
    %c1 = arith.constant 1 : index
    %c0_10 = arith.constant 0 : index
    %c0_11 = arith.constant 0 : index
    %16 = vector.load %arg2[%c1, %c0_10, %c0_11] : memref<2x4x256xf32, #tpu.memory_space<vmem>>, vector<1x4x256xf32>
    %17 = vector.shape_cast %16 : vector<1x4x256xf32> to vector<4x256xf32>
    %cst_12 = arith.constant dense<0.000000e+00> : vector<8x256xf32>
    %18 = tpu.matmul %0, %17, %cst_12 {dimension_numbers = #tpu.dot_dimension_numbers<[1], [0], [0], [1], [0, 0, 1, 1], [], []>} : vector<8x4xf32>, vector<4x256xf32>, vector<8x256xf32> -> vector<8x256xf32>
    %19 = vector.broadcast %1 : vector<8x1xf32> to vector<8x256xf32>
    %20 = arith.addf %18, %19 : vector<8x256xf32>
    %21 = arith.negf %20 : vector<8x256xf32>
    %22 = math.exp %21 : vector<8x256xf32>
    %cst_13 = arith.constant 1.000000e+00 : f32
    %23 = vector.broadcast %cst_13 : f32 to vector<8x256xf32>
    %24 = arith.addf %23, %22 : vector<8x256xf32>
    %25 = arith.divf %23, %24 : vector<8x256xf32>
    %26 = arith.mulf %20, %25 : vector<8x256xf32>
    %c1_14 = arith.constant 1 : index
    %c0_15 = arith.constant 0 : index
    %c0_16 = arith.constant 0 : index
    %27 = vector.load %arg5[%c1_14, %c0_15, %c0_16] : memref<2x8x256xf32, #tpu.memory_space<vmem>>, vector<1x8x256xf32>
    %28 = vector.shape_cast %27 : vector<1x8x256xf32> to vector<8x256xf32>
    %29 = vector.shape_cast %26 : vector<8x256xf32> to vector<1x8x256xf32>
    tpu.vector_store %arg5[%c1_14, %c0_15, %c0_16], %29 {strides = array<i32>} : memref<2x8x256xf32, #tpu.memory_space<vmem>>, vector<1x8x256xf32>,
    return
  }
  func.func @transform_0(%arg0: i32, %arg1: i32) -> (i32, i32, i32) {
    %c0_i32 = arith.constant 0 : i32
    %c0_i32_0 = arith.constant 0 : i32
    return %arg1, %c0_i32, %arg0 : i32, i32, i32
  }
  func.func @transform_1(%arg0: i32, %arg1: i32) -> (i32, i32) {
    %c0_i32 = arith.constant 0 : i32
    %c0_i32_0 = arith.constant 0 : i32
    %c0_i32_1 = arith.constant 0 : i32
    return %c0_i32, %c0_i32_0 : i32, i32
  }
  func.func @transform_2(%arg0: i32, %arg1: i32) -> (i32, i32) {
    %c0_i32 = arith.constant 0 : i32
    %c0_i32_0 = arith.constant 0 : i32
    %c0_i32_1 = arith.constant 0 : i32
    return %c0_i32, %c0_i32_0 : i32, i32
  }
  func.func @transform_3(%arg0: i32, %arg1: i32) -> (i32, i32, i32) {
    %c0_i32 = arith.constant 0 : i32
    %c0_i32_0 = arith.constant 0 : i32
    return %arg1, %c0_i32, %arg0 : i32, i32, i32
  }
}

</mosaic_0001>

<llo_original>
// kernel: tpu_custom_call.1
$region0: #{tpu_custom_call.1}
  #allocation0 [shape = 'u32[]', space=smem, size = 0x4, offset = 0x4, fixed_abs, tag = 'smem constant byte address 0x4 - core index']
  #allocation1 [shape = 'u32[144,128]{1,0:T(1,128)}', space=vmem, size = 0x12000, scoped, tag = 'internal scratch']
  %s0 = inlined_call_operand.vmem [shape: f32[2,4,256], index: 0, kind: input, shape index: {}]
  %s1 = inlined_call_operand.vmem [shape: f32[8,4], index: 1, kind: input, shape index: {}]
  %s2 = inlined_call_operand.vmem [shape: f32[8,1], index: 2, kind: input, shape index: {}]
  %s3 = inlined_call_operand.hbm [shape: f32[2,8,256], index: 3, kind: output, shape index: {}]
  %s4 = sld [smem:[#allocation0]]
  $region22: #{tpu_custom_call.1} parent=0
    _
  %s6 = ssub.s32 1, %s4
  %s7 = scalar_select 0, %s6, %s4
  $region1: #{tpu_custom_call.1} parent=0
    #allocation2 [shape = 'u8[16384]{0}', space=vmem, size = 0x4000, scoped, tag = 'output window, operand 0, single buffered']
    #allocation3 [shape = 's32[1]{0}', space=sflag, size = 0x4, scoped, tag = 'scoped memory for tpu_custom_call.1']
    %8 = vsyncpa [#allocation3], 0
    // Predicated region
    $region2: #{tpu_custom_call.1} parent=1 // pred_check
      _
    $region3: #{tpu_custom_call.1} parent=1 // pred_check_branch
      %10 = sbr.rel (0) target = $region5
    $region4: #{tpu_custom_call.1} parent=1 // pred_region
      _
    $region5: #{tpu_custom_call.1} parent=1 // pred_fallthru
      _
    // Predicated region
    $region6: #{tpu_custom_call.1} parent=1 // pred_check
      _
    $region7: #{tpu_custom_call.1} parent=1 // pred_check_branch
      %12 = sbr.rel (0) target = $region9
    $region8: #{tpu_custom_call.1} parent=1 // pred_region
      _
    $region9: #{tpu_custom_call.1} parent=1 // pred_fallthru
      _
    // Predicated region
    $region10: #{tpu_custom_call.1} parent=1 // pred_check
      _
    $region11: #{tpu_custom_call.1} parent=1 // pred_check_branch
      %14 = sbr.rel (0) target = $region13
    $region12: #{tpu_custom_call.1} parent=1 // pred_region
      _
    $region13: #{tpu_custom_call.1} parent=1 // pred_fallthru
      _
    %v15 = vld [vmem:[%s1] sm:$0xff]
    %v16 = vld [vmem:[%s2] sm:$0xff]
    %v17 = vld [vmem:[%s0] sm:$0xff]
    %19 = vset.pattern.permute.xlu0 0
    %20 = vperm.xlu0 %19, %v16
    %v21 = vpop.permute.xlu0 %20
    %v24 = vcombine.high %v17, %v17
    %vm25 = vcmask 31744
    %v27 = vsel %vm25, %v15, 0
    %vm29 = vcmask 1043456
    %v30 = vsel %vm29, %v17, 0
    %v32 = vsel %vm29, %v24, 0
    %34 = vmatprep.subr.mxu0 %v32
    %35 = vmatpush1.msra.mxu0 %v30
    %36 = vmatprep.subr.mxu0 0.0
    %37 = vmatpush1.msra.mxu0 0.0
    %38 = vmatprep.subr.mxu0 0.0
    %39 = vmatpush1.msra.mxu0 0.0
    %40 = vmatprep.subr.mxu0 0.0
    %41 = vmatpush1.msra.mxu0 0.0
    %42 = vmatprep.subr.mxu0 0.0
    %43 = vmatpush1.msra.mxu0 0.0
    %44 = vmatprep.subr.mxu0 0.0
    %45 = vmatpush1.msra.mxu0 0.0
    %46 = vmatprep.subr.mxu0 0.0
    %47 = vmatpush1.msra.mxu0 0.0
    %48 = vmatprep.subr.mxu0 0.0
    %49 = vmatpush1.msra.mxu0 0.0
    %50 = vmatprep.subr.mxu0 0.0
    %51 = vmatpush1.msra.mxu0 0.0
    %52 = vmatprep.subr.mxu0 0.0
    %53 = vmatpush1.msra.mxu0 0.0
    %54 = vmatprep.subr.mxu0 0.0
    %55 = vmatpush1.msra.mxu0 0.0
    %56 = vmatprep.subr.mxu0 0.0
    %57 = vmatpush1.msra.mxu0 0.0
    %58 = vmatprep.subr.mxu0 0.0
    %59 = vmatpush1.msra.mxu0 0.0
    %60 = vmatprep.subr.mxu0 0.0
    %61 = vmatpush1.msra.mxu0 0.0
    %62 = vmatprep.subr.mxu0 0.0
    %63 = vmatpush1.msra.mxu0 0.0
    %64 = vmatprep.subr.mxu0 0.0
    %65 = vmatpush1.msra.mxu0 0.0
    %66 = vmatprep.subr.mxu0 0.0
    %67 = vmatpush1.msra.mxu0 0.0
    %68 = vmatprep.subr.mxu0 0.0
    %69 = vmatpush1.msra.mxu0 0.0
    %70 = vmatprep.subr.mxu0 0.0
    %71 = vmatpush1.msra.mxu0 0.0
    %72 = vmatprep.subr.mxu0 0.0
    %73 = vmatpush1.msra.mxu0 0.0
    %74 = vmatprep.subr.mxu0 0.0
    %75 = vmatpush1.msra.mxu0 0.0
    %76 = vmatprep.subr.mxu0 0.0
    %77 = vmatpush1.msra.mxu0 0.0
    %78 = vmatprep.subr.mxu0 0.0
    %79 = vmatpush1.msra.mxu0 0.0
    %80 = vmatprep.subr.mxu0 0.0
    %81 = vmatpush1.msra.mxu0 0.0
    %82 = vmatprep.subr.mxu0 0.0
    %83 = vmatpush1.msra.mxu0 0.0
    %84 = vmatprep.subr.mxu0 0.0
    %85 = vmatpush1.msra.mxu0 0.0
    %86 = vmatprep.subr.mxu0 0.0
    %87 = vmatpush1.msra.mxu0 0.0
    %88 = vmatprep.subr.mxu0 0.0
    %89 = vmatpush1.msra.mxu0 0.0
    %90 = vmatprep.subr.mxu0 0.0
    %91 = vmatpush1.msra.mxu0 0.0
    %92 = vmatprep.subr.mxu0 0.0
    %93 = vmatpush1.msra.mxu0 0.0
    %94 = vmatprep.subr.mxu0 0.0
    %95 = vmatpush1.msra.mxu0 0.0
    %96 = vmatprep.subr.mxu0 0.0
    %97 = vmatpush1.msra.mxu0 0.0
    %98 = vmatprep.mubr.f32.mxu0 0.0
    %99 = vmatmul.mubr.f32.gmra.mrb[0].mxu0 %v27
    %v100 = vpop.f32.mrb[0].mxu0
    %v101 = vadd.f32 %v21, %v100
    %v102 = vpop.f32.mrb[0].mxu0
    %v103 = vadd.f32 %v21, %v102
    %104 = vdwg.mxu0
    %v105 = vxor.u32 %v101, 2147483648
    %v106 = vxor.u32 %v103, 2147483648
    %v107 = vmul.f32 %v105, 1.442695
    %v108 = vpow.pop %v107
    %v109 = vmul.f32 %v106, 1.442695
    %v110 = vpow.pop %v109
    %v111 = vadd.f32 %v108, 1.0
    %v112 = vadd.f32 %v110, 1.0
    %v113 = vrcp.pop %v111
    %v114 = vmul.f32 1.0, %v113
    %v115 = vrcp.pop %v112
    %v116 = vmul.f32 1.0, %v115
    %v117 = vmul.f32 %v101, %v114
    %v118 = vmul.f32 %v103, %v116
    %119 = vst [vmem:[#allocation2] sm:$0xff] %v117
    %120 = vst [vmem:[#allocation2 + $0x8] sm:$0xff] %v118
    %s121 = scalar_lea.vmem %s0, 8
    %v122 = vld [vmem:[%s121] sm:$0xff]
    %v124 = vcombine.high %v122, %v122
    %v125 = vsel %vm29, %v122, 0
    %v127 = vsel %vm29, %v124, 0
    %129 = vmatprep.subr.mxu0 %v127
    %130 = vmatpush1.msra.mxu0 %v125
    %131 = vmatprep.subr.mxu0 0.0
    %132 = vmatpush1.msra.mxu0 0.0
    %133 = vmatprep.subr.mxu0 0.0
    %134 = vmatpush1.msra.mxu0 0.0
    %135 = vmatprep.subr.mxu0 0.0
    %136 = vmatpush1.msra.mxu0 0.0
    %137 = vmatprep.subr.mxu0 0.0
    %138 = vmatpush1.msra.mxu0 0.0
    %139 = vmatprep.subr.mxu0 0.0
    %140 = vmatpush1.msra.mxu0 0.0
    %141 = vmatprep.subr.mxu0 0.0
    %142 = vmatpush1.msra.mxu0 0.0
    %143 = vmatprep.subr.mxu0 0.0
    %144 = vmatpush1.msra.mxu0 0.0
    %145 = vmatprep.subr.mxu0 0.0
    %146 = vmatpush1.msra.mxu0 0.0
    %147 = vmatprep.subr.mxu0 0.0
    %148 = vmatpush1.msra.mxu0 0.0
    %149 = vmatprep.subr.mxu0 0.0
    %150 = vmatpush1.msra.mxu0 0.0
    %151 = vmatprep.subr.mxu0 0.0
    %152 = vmatpush1.msra.mxu0 0.0
    %153 = vmatprep.subr.mxu0 0.0
    %154 = vmatpush1.msra.mxu0 0.0
    %155 = vmatprep.subr.mxu0 0.0
    %156 = vmatpush1.msra.mxu0 0.0
    %157 = vmatprep.subr.mxu0 0.0
    %158 = vmatpush1.msra.mxu0 0.0
    %159 = vmatprep.subr.mxu0 0.0
    %160 = vmatpush1.msra.mxu0 0.0
    %161 = vmatprep.subr.mxu0 0.0
    %162 = vmatpush1.msra.mxu0 0.0
    %163 = vmatprep.subr.mxu0 0.0
    %164 = vmatpush1.msra.mxu0 0.0
    %165 = vmatprep.subr.mxu0 0.0
    %166 = vmatpush1.msra.mxu0 0.0
    %167 = vmatprep.subr.mxu0 0.0
    %168 = vmatpush1.msra.mxu0 0.0
    %169 = vmatprep.subr.mxu0 0.0
    %170 = vmatpush1.msra.mxu0 0.0
    %171 = vmatprep.subr.mxu0 0.0
    %172 = vmatpush1.msra.mxu0 0.0
    %173 = vmatprep.subr.mxu0 0.0
    %174 = vmatpush1.msra.mxu0 0.0
    %175 = vmatprep.subr.mxu0 0.0
    %176 = vmatpush1.msra.mxu0 0.0
    %177 = vmatprep.subr.mxu0 0.0
    %178 = vmatpush1.msra.mxu0 0.0
    %179 = vmatprep.subr.mxu0 0.0
    %180 = vmatpush1.msra.mxu0 0.0
    %181 = vmatprep.subr.mxu0 0.0
    %182 = vmatpush1.msra.mxu0 0.0
    %183 = vmatprep.subr.mxu0 0.0
    %184 = vmatpush1.msra.mxu0 0.0
    %185 = vmatprep.subr.mxu0 0.0
    %186 = vmatpush1.msra.mxu0 0.0
    %187 = vmatprep.subr.mxu0 0.0
    %188 = vmatpush1.msra.mxu0 0.0
    %189 = vmatprep.subr.mxu0 0.0
    %190 = vmatpush1.msra.mxu0 0.0
    %191 = vmatprep.subr.mxu0 0.0
    %192 = vmatpush1.msra.mxu0 0.0
    %193 = vmatprep.mubr.f32.mxu0 0.0
    %194 = vmatmul.mubr.f32.gmra.mrb[0].mxu0 %v27
    %v195 = vpop.f32.mrb[0].mxu0
    %v196 = vadd.f32 %v21, %v195
    %v197 = vpop.f32.mrb[0].mxu0
    %v198 = vadd.f32 %v21, %v197
    %199 = vdwg.mxu0
    %v200 = vxor.u32 %v196, 2147483648
    %v201 = vxor.u32 %v198, 2147483648
    %v202 = vmul.f32 %v200, 1.442695
    %v203 = vpow.pop %v202
    %v204 = vmul.f32 %v201, 1.442695
    %v205 = vpow.pop %v204
    %v206 = vadd.f32 %v203, 1.0
    %v207 = vadd.f32 %v205, 1.0
    %v208 = vrcp.pop %v206
    %v209 = vmul.f32 1.0, %v208
    %v210 = vrcp.pop %v207
    %v211 = vmul.f32 1.0, %v210
    %v212 = vmul.f32 %v196, %v209
    %v213 = vmul.f32 %v198, %v211
    %s214 = scalar_lea.vmem [#allocation2], 16
    %215 = vst [vmem:[%s214] sm:$0xff] %v212
    %216 = vst [vmem:[%s214 + $0x8] sm:$0xff] %v213
    // Predicated region
    $region14: #{tpu_custom_call.1} parent=1 // pred_check
      _
    $region15: #{tpu_custom_call.1} parent=1 // pred_check_branch
      %218 = sbr.rel (0) target = $region17
    $region16: #{tpu_custom_call.1} parent=1 // pred_region
      %s220 = ssub.s32 512, 512
      %221 = vsyncadd [#allocation3], %s220
      %s222 = sshll.u32 [#allocation2], 4
      %s223 = int_to_ptr.vmem [resolvable:$true] %s222
      %228 = dma.vmem_to_hbm [thread:$0]  %s223, 512, %s3, [#allocation3], 256, 256, 16
    $region17: #{tpu_custom_call.1} parent=1 // pred_fallthru
      _
    // Predicated region
    $region18: #{tpu_custom_call.1} parent=1 // pred_check
      _
    $region19: #{tpu_custom_call.1} parent=1 // pred_check_branch
      %230 = sbr.rel (0) target = $region21
    $region20: #{tpu_custom_call.1} parent=1 // pred_region
      %231 = dma.done [#allocation3], 512
    $region21: #{tpu_custom_call.1} parent=1 // pred_fallthru
      _
    %232 = vsyncpa [#allocation3], 1

</llo_original>
